<compile_context>
chip_gen: v6e
topology: v6e:2x2x1
jax: 0.10.0
libtpu: 0.0.40
codegen_flags: <defaults>
</compile_context>

<pallas_src>
import jax
import jax.numpy as jnp
from jax.experimental import pallas as pl
from jax.experimental.pallas import tpu as pltpu


def mlp_kernel(w1_ref, b1_ref, w2_ref, b2_ref, x_ref, o_ref):
    # x_ref: (12, TB) feature-major tile; batch is the lane dimension.
    x = x_ref[...]                                                  # (12, TB)
    # Layer 1: (6,12) @ (12,TB) -> (6,TB); B is the wide MXU N dimension.
    h = jnp.dot(w1_ref[...], x,
                preferred_element_type=jnp.float32) + b1_ref[...]   # (6, TB)
    h = jnp.maximum(h, 0.0)                                         # ReLU
    # Layer 2: (1,6) @ (6,TB) -> (1,TB)
    y = jnp.dot(w2_ref[...], h,
                preferred_element_type=jnp.float32) + b2_ref[...]   # (1, TB)
    y = jnp.maximum(y, 0.0)                                         # ReLU
    o_ref[...] = jax.nn.sigmoid(y).astype(o_ref.dtype)              # Sigmoid


def mlp_forward(x, w1, b1, w2, b2, *, block_b=1024):
    """x: (B, 12) row-major (PyTorch convention).
    w1: (6, 12), b1: (6, 1), w2: (1, 6), b2: (1, 1)  (nn.Linear weight layout).
    Returns (B, 1) float32."""
    B = x.shape[0]
    in_f = w1.shape[1]

    # Lane-dense batch tile: multiple of 128, capped at block_b (fits easily in
    # the 64 MiB v7x VMEM: 2 x 12*1024*4B x-buffers + 2 x 1*1024*4B out-buffers).
    tb = min(block_b, pl.cdiv(B, 128) * 128)
    b_pad = pl.cdiv(B, tb) * tb

    # Transpose to feature-major and zero-pad the batch to a tile multiple.
    # TODO(synk): stream x/out as bf16 (upcast in-kernel) if dtype is negotiable
    # to halve HBM bytes; kept f32 here to match the PyTorch reference exactly.
    xt = jnp.zeros((in_f, b_pad), jnp.float32).at[:, :B].set(
        x.T.astype(jnp.float32))

    out = pl.pallas_call(
        mlp_kernel,
        out_shape=jax.ShapeDtypeStruct((1, b_pad), jnp.float32),
        grid=(b_pad // tb,),
        in_specs=[
            # Weights / biases: whole-array VMEM residents, fetched once.
            pl.BlockSpec(w1.shape, lambda i: (0, 0)),
            pl.BlockSpec(b1.shape, lambda i: (0, 0)),
            pl.BlockSpec(w2.shape, lambda i: (0, 0)),
            pl.BlockSpec(b2.shape, lambda i: (0, 0)),
            # Activations: streamed / double-buffered along the batch grid.
            pl.BlockSpec((in_f, tb), lambda i: (0, i)),
        ],
        out_specs=pl.BlockSpec((1, tb), lambda i: (0, i)),
        compiler_params=pltpu.CompilerParams(
            dimension_semantics=("parallel",),      # split batch over v7x TCs
            vmem_limit_bytes=32 * 1024 * 1024,      # safe on v5e/v6e/v7x
        ),
    )(w1, b1, w2, b2, xt)

    return out[0, :B][:, None]                                      # (B, 1)


def init_params(key):
    # PyTorch nn.Linear default init: U[-1/sqrt(fan_in), 1/sqrt(fan_in)],
    # weights stored as (out_features, in_features), biases as (out, 1).
    k1, k2, k3, k4 = jax.random.split(key, 4)
    lim1 = 1.0 / jnp.sqrt(12.0)
    lim2 = 1.0 / jnp.sqrt(6.0)
    w1 = jax.random.uniform(k1, (6, 12), jnp.float32, -lim1, lim1)
    b1 = jax.random.uniform(k2, (6, 1), jnp.float32, -lim1, lim1)
    w2 = jax.random.uniform(k3, (1, 6), jnp.float32, -lim2, lim2)
    b2 = jax.random.uniform(k4, (1, 1), jnp.float32, -lim2, lim2)
    return w1, b1, w2, b2


def reference_forward(x, w1, b1, w2, b2):
    h = jnp.maximum(x @ w1.T + b1[:, 0], 0.0)
    y = jnp.maximum(h @ w2.T + b2[:, 0], 0.0)
    return jax.nn.sigmoid(y)


if __name__ == "__main__":
    key = jax.random.PRNGKey(0)
    kx, kx2, kp = jax.random.split(key, 3)
    w1, b1, w2, b2 = init_params(kp)

    # Small shape consistent with the module (batch=8, in_features=12).
    B = 8
    x = jax.random.normal(kx, (B, 12), jnp.float32)
    out = jax.block_until_ready(mlp_forward(x, w1, b1, w2, b2))
    ref = reference_forward(x, w1, b1, w2, b2)
    assert out.shape == (B, 1)
    assert jnp.allclose(out, ref, atol=1e-5, rtol=1e-5)

    # Also exercise the multi-step batch grid (tiling + padding path).
    B2 = 4096
    x2 = jax.random.normal(kx2, (B2, 12), jnp.float32)
    out2 = jax.block_until_ready(mlp_forward(x2, w1, b1, w2, b2))
    ref2 = reference_forward(x2, w1, b1, w2, b2)
    assert out2.shape == (B2, 1)
    assert jnp.allclose(out2, ref2, atol=1e-5, rtol=1e-5)

    print("KERNEL_OK")
</pallas_src>

<mosaic_0001>
module attributes {stable_mosaic.version = 11 : i64} {
  func.func @mlp_kernel(%arg0: i32, %arg1: memref<6x12xf32, #tpu.memory_space<vmem>>, %arg2: memref<6x1xf32, #tpu.memory_space<vmem>>, %arg3: memref<1x6xf32, #tpu.memory_space<vmem>>, %arg4: memref<1x1xf32, #tpu.memory_space<vmem>>, %arg5: memref<12x128xf32, #tpu.memory_space<vmem>>, %arg6: memref<1x128xf32, #tpu.memory_space<vmem>>) attributes {dimension_semantics = [#tpu.dimension_semantics<parallel>], iteration_bounds = array<i64: 1>, scalar_prefetch = 0 : i64, scratch_operands = 0 : i64, tpu.core_type = #tpu.core_type<tc>, window_params = [{pipeline_mode = #tpu.pipeline_mode<synchronous>, transform_indices = @transform_0, window_bounds = array<i64: 6, 12>}, {pipeline_mode = #tpu.pipeline_mode<synchronous>, transform_indices = @transform_1, window_bounds = array<i64: 6, 1>}, {pipeline_mode = #tpu.pipeline_mode<synchronous>, transform_indices = @transform_2, window_bounds = array<i64: 1, 6>}, {pipeline_mode = #tpu.pipeline_mode<synchronous>, transform_indices = @transform_3, window_bounds = array<i64: 1, 1>}, {transform_indices = @transform_4, window_bounds = array<i64: 12, 128>}, {transform_indices = @transform_5, window_bounds = array<i64: 1, 128>}]} {
    %c0 = arith.constant 0 : index
    %c0_0 = arith.constant 0 : index
    %0 = vector.load %arg5[%c0, %c0_0] : memref<12x128xf32, #tpu.memory_space<vmem>>, vector<12x128xf32>
    %c0_1 = arith.constant 0 : index
    %c0_2 = arith.constant 0 : index
    %1 = vector.load %arg1[%c0_1, %c0_2] : memref<6x12xf32, #tpu.memory_space<vmem>>, vector<6x12xf32>
    %cst = arith.constant dense<0.000000e+00> : vector<6x128xf32>
    %2 = tpu.matmul %1, %0, %cst {dimension_numbers = #tpu.dot_dimension_numbers<[1], [0], [0], [1], [0, 0, 1, 1], [], []>} : vector<6x12xf32>, vector<12x128xf32>, vector<6x128xf32> -> vector<6x128xf32>
    %c0_3 = arith.constant 0 : index
    %c0_4 = arith.constant 0 : index
    %3 = vector.load %arg2[%c0_3, %c0_4] : memref<6x1xf32, #tpu.memory_space<vmem>>, vector<6x1xf32>
    %4 = vector.broadcast %3 : vector<6x1xf32> to vector<6x128xf32>
    %5 = arith.addf %2, %4 : vector<6x128xf32>
    %cst_5 = arith.constant 0.000000e+00 : f32
    %6 = vector.broadcast %cst_5 : f32 to vector<6x128xf32>
    %7 = arith.maximumf %5, %6 : vector<6x128xf32>
    %c0_6 = arith.constant 0 : index
    %c0_7 = arith.constant 0 : index
    %8 = vector.load %arg3[%c0_6, %c0_7] : memref<1x6xf32, #tpu.memory_space<vmem>>, vector<1x6xf32>
    %cst_8 = arith.constant dense<0.000000e+00> : vector<1x128xf32>
    %9 = tpu.matmul %8, %7, %cst_8 {dimension_numbers = #tpu.dot_dimension_numbers<[1], [0], [0], [1], [0, 0, 1, 1], [], []>} : vector<1x6xf32>, vector<6x128xf32>, vector<1x128xf32> -> vector<1x128xf32>
    %c0_9 = arith.constant 0 : index
    %c0_10 = arith.constant 0 : index
    %10 = vector.load %arg4[%c0_9, %c0_10] : memref<1x1xf32, #tpu.memory_space<vmem>>, vector<1x1xf32>
    %11 = vector.broadcast %10 : vector<1x1xf32> to vector<1x128xf32>
    %12 = arith.addf %9, %11 : vector<1x128xf32>
    %cst_11 = arith.constant 0.000000e+00 : f32
    %13 = vector.broadcast %cst_11 : f32 to vector<1x128xf32>
    %14 = arith.maximumf %12, %13 : vector<1x128xf32>
    %15 = arith.negf %14 : vector<1x128xf32>
    %16 = math.exp %15 : vector<1x128xf32>
    %cst_12 = arith.constant 1.000000e+00 : f32
    %17 = vector.broadcast %cst_12 : f32 to vector<1x128xf32>
    %18 = arith.addf %17, %16 : vector<1x128xf32>
    %19 = arith.divf %17, %18 : vector<1x128xf32>
    %c0_13 = arith.constant 0 : index
    %c0_14 = arith.constant 0 : index
    %20 = vector.load %arg6[%c0_13, %c0_14] : memref<1x128xf32, #tpu.memory_space<vmem>>, vector<1x128xf32>
    tpu.vector_store %arg6[%c0_13, %c0_14], %19 {strides = array<i32>} : memref<1x128xf32, #tpu.memory_space<vmem>>, vector<1x128xf32>,
    return
  }
  func.func @transform_0(%arg0: i32) -> (i32, i32) {
    %c0_i32 = arith.constant 0 : i32
    %c0_i32_0 = arith.constant 0 : i32
    %c0_i32_1 = arith.constant 0 : i32
    return %c0_i32, %c0_i32_0 : i32, i32
  }
  func.func @transform_1(%arg0: i32) -> (i32, i32) {
    %c0_i32 = arith.constant 0 : i32
    %c0_i32_0 = arith.constant 0 : i32
    %c0_i32_1 = arith.constant 0 : i32
    return %c0_i32, %c0_i32_0 : i32, i32
  }
  func.func @transform_2(%arg0: i32) -> (i32, i32) {
    %c0_i32 = arith.constant 0 : i32
    %c0_i32_0 = arith.constant 0 : i32
    %c0_i32_1 = arith.constant 0 : i32
    return %c0_i32, %c0_i32_0 : i32, i32
  }
  func.func @transform_3(%arg0: i32) -> (i32, i32) {
    %c0_i32 = arith.constant 0 : i32
    %c0_i32_0 = arith.constant 0 : i32
    %c0_i32_1 = arith.constant 0 : i32
    return %c0_i32, %c0_i32_0 : i32, i32
  }
  func.func @transform_4(%arg0: i32) -> (i32, i32) {
    %c0_i32 = arith.constant 0 : i32
    %c0_i32_0 = arith.constant 0 : i32
    return %c0_i32, %arg0 : i32, i32
  }
  func.func @transform_5(%arg0: i32) -> (i32, i32) {
    %c0_i32 = arith.constant 0 : i32
    %c0_i32_0 = arith.constant 0 : i32
    return %c0_i32, %arg0 : i32, i32
  }
}

</mosaic_0001>

<llo_original>
// kernel: tpu_custom_call.1
$region0: #{tpu_custom_call.1}
  #allocation0 [shape = 'u32[]', space=smem, size = 0x4, offset = 0x4, fixed_abs, tag = 'smem constant byte address 0x4 - core index']
  #allocation1 [shape = 'u32[144,128]{1,0:T(1,128)}', space=vmem, size = 0x12000, scoped, tag = 'internal scratch']
  #allocation2 [shape = 'f32[1,1]{1,0:T(1,128)S(1)}', space=vmem, size = 0x200, scoped, tag = 'scoped memory for tpu_custom_call.1']
  %s0 = inlined_call_operand.hbm [shape: f32[6,12], index: 0, kind: input, shape index: {}]
  %s1 = inlined_call_operand.vmem [shape: f32[6,1], index: 1, kind: input, shape index: {}]
  %s2 = inlined_call_operand.hbm [shape: f32[1,6], index: 2, kind: input, shape index: {}]
  %s3 = inlined_call_operand.<no memory space> [shape: f32[1,1], index: 3, kind: input, shape index: {}]
  %s4 = inlined_call_operand.vmem [shape: f32[12,128], index: 4, kind: input, shape index: {}]
  %s5 = inlined_call_operand.hbm [shape: f32[1,128], index: 5, kind: output, shape index: {}]
  %s6 = sld [smem:[#allocation0]]
  $region38: #{tpu_custom_call.1} parent=0
    _
  %s8 = ssub.s32 1, %s6
  %s9 = scalar_select 0, %s8, %s6
  %v10 = vstv %s3
  %11 = vst [vmem:[#allocation2] sm:$0x1] %v10
  $region1: #{tpu_custom_call.1} parent=0
    #allocation3 [shape = 'u8[4096]{0}', space=vmem, size = 0x1000, scoped, tag = 'input window, operand 0, single buffered']
    #allocation4 [shape = 's32[1]{0}', space=sflag, size = 0x4, scoped, tag = 'scoped memory for tpu_custom_call.1']
    #allocation5 [shape = 's32[1]{0}', space=sflag, size = 0x4, scoped, tag = 'scoped memory for tpu_custom_call.1']
    #allocation6 [shape = 'u8[512]{0}', space=vmem, size = 0x400, scoped, tag = 'input window, operand 2, single buffered']
    #allocation7 [shape = 's32[1]{0}', space=sflag, size = 0x4, scoped, tag = 'scoped memory for tpu_custom_call.1']
    #allocation8 [shape = 'u8[512]{0}', space=vmem, size = 0x400, scoped, tag = 'output window, operand 0, single buffered']
    %12 = vsyncpa [#allocation4], 0
    %13 = vsyncpa [#allocation7], 0
    %14 = vsyncpa [#allocation5], 0
    // Predicated region
    $region2: #{tpu_custom_call.1} parent=1 // pred_check
      _
    $region3: #{tpu_custom_call.1} parent=1 // pred_check_branch
      %16 = sbr.rel (0) target = $region5
    $region4: #{tpu_custom_call.1} parent=1 // pred_region
      %s18 = ssub.s32 128, 128
      %19 = vsyncadd [#allocation4], %s18
      %s21 = sshll.u32 [#allocation3], 4
      %s22 = int_to_ptr.vmem [resolvable:$true] %s21
      %24 = dma.hbm_to_vmem [thread:$0]  %s0, 128, %s22, [#allocation4]
    $region5: #{tpu_custom_call.1} parent=1 // pred_fallthru
      _
    // Predicated region
    $region6: #{tpu_custom_call.1} parent=1 // pred_check
      _
    $region7: #{tpu_custom_call.1} parent=1 // pred_check_branch
      %26 = sbr.rel (0) target = $region9
    $region8: #{tpu_custom_call.1} parent=1 // pred_region
      _
    $region9: #{tpu_custom_call.1} parent=1 // pred_fallthru
      _
    // Predicated region
    $region10: #{tpu_custom_call.1} parent=1 // pred_check
      _
    $region11: #{tpu_custom_call.1} parent=1 // pred_check_branch
      %28 = sbr.rel (0) target = $region13
    $region12: #{tpu_custom_call.1} parent=1 // pred_region
      %s30 = ssub.s32 16, 16
      %31 = vsyncadd [#allocation7], %s30
      %s33 = sshll.u32 [#allocation6], 4
      %s34 = int_to_ptr.vmem [resolvable:$true] %s33
      %36 = dma.hbm_to_vmem [thread:$0]  %s2, 16, %s34, [#allocation7]
    $region13: #{tpu_custom_call.1} parent=1 // pred_fallthru
      _
    // Predicated region
    $region14: #{tpu_custom_call.1} parent=1 // pred_check
      _
    $region15: #{tpu_custom_call.1} parent=1 // pred_check_branch
      %38 = sbr.rel (0) target = $region17
    $region16: #{tpu_custom_call.1} parent=1 // pred_region
      _
    $region17: #{tpu_custom_call.1} parent=1 // pred_fallthru
      _
    // Predicated region
    $region18: #{tpu_custom_call.1} parent=1 // pred_check
      _
    $region19: #{tpu_custom_call.1} parent=1 // pred_check_branch
      %40 = sbr.rel (0) target = $region21
    $region20: #{tpu_custom_call.1} parent=1 // pred_region
      _
    $region21: #{tpu_custom_call.1} parent=1 // pred_fallthru
      _
    // Predicated region
    $region22: #{tpu_custom_call.1} parent=1 // pred_check
      _
    $region23: #{tpu_custom_call.1} parent=1 // pred_check_branch
      %42 = sbr.rel (0) target = $region25
    $region24: #{tpu_custom_call.1} parent=1 // pred_region
      %43 = dma.done [#allocation4], 128
    $region25: #{tpu_custom_call.1} parent=1 // pred_fallthru
      _
    // Predicated region
    $region26: #{tpu_custom_call.1} parent=1 // pred_check
      _
    $region27: #{tpu_custom_call.1} parent=1 // pred_check_branch
      %45 = sbr.rel (0) target = $region29
    $region28: #{tpu_custom_call.1} parent=1 // pred_region
      %46 = dma.done [#allocation7], 16
    $region29: #{tpu_custom_call.1} parent=1 // pred_fallthru
      _
    %v47 = vld [vmem:[%s4] sm:$0xff]
    %v48 = vld [vmem:[%s4 + $0x8] sm:$0xf]
    %v49 = vld [vmem:[#allocation3] sm:$0x3f]
    %v50 = vld [vmem:[%s1] sm:$0x3f]
    %52 = vset.pattern.permute.xlu0 0
    %53 = vperm.xlu0 %52, %v50
    %v54 = vpop.permute.xlu0 %53
    %vm56 = vcmask 97280
    %v58 = vsel %vm56, %v49, 0
    %vm60 = vcmask 1043456
    %v62 = vsel %vm60, %v48, 0
    %64 = vmatprep.subr.mxu0 0.0
    %65 = vmatpush1.msra.mxu0 0.0
    %66 = vmatprep.subr.mxu0 0.0
    %67 = vmatpush1.msra.mxu0 0.0
    %68 = vmatprep.subr.mxu0 0.0
    %69 = vmatpush1.msra.mxu0 0.0
    %70 = vmatprep.subr.mxu0 0.0
    %71 = vmatpush1.msra.mxu0 0.0
    %72 = vmatprep.subr.mxu0 0.0
    %73 = vmatpush1.msra.mxu0 0.0
    %74 = vmatprep.subr.mxu0 0.0
    %75 = vmatpush1.msra.mxu0 0.0
    %76 = vmatprep.subr.mxu0 0.0
    %77 = vmatpush1.msra.mxu0 0.0
    %78 = vmatprep.subr.mxu0 0.0
    %79 = vmatpush1.msra.mxu0 0.0
    %80 = vmatprep.subr.mxu0 0.0
    %81 = vmatpush1.msra.mxu0 0.0
    %82 = vmatprep.subr.mxu0 0.0
    %83 = vmatpush1.msra.mxu0 0.0
    %84 = vmatprep.subr.mxu0 0.0
    %85 = vmatpush1.msra.mxu0 0.0
    %86 = vmatprep.subr.mxu0 0.0
    %87 = vmatpush1.msra.mxu0 0.0
    %88 = vmatprep.subr.mxu0 0.0
    %89 = vmatpush1.msra.mxu0 0.0
    %90 = vmatprep.subr.mxu0 0.0
    %91 = vmatpush1.msra.mxu0 0.0
    %92 = vmatprep.subr.mxu0 0.0
    %93 = vmatpush1.msra.mxu0 %v62
    %94 = vmatprep.subr.mxu0 0.0
    %95 = vmatpush1.msra.mxu0 %v47
    %96 = vmatprep.subr.mxu0 0.0
    %97 = vmatpush2.msra.mxu0 0.0
    %98 = vmatprep.subr.mxu0 0.0
    %99 = vmatpush2.msra.mxu0 0.0
    %100 = vmatprep.subr.mxu0 0.0
    %101 = vmatpush2.msra.mxu0 0.0
    %102 = vmatprep.subr.mxu0 0.0
    %103 = vmatpush2.msra.mxu0 0.0
    %104 = vmatprep.subr.mxu0 0.0
    %105 = vmatpush2.msra.mxu0 0.0
    %106 = vmatprep.subr.mxu0 0.0
    %107 = vmatpush2.msra.mxu0 0.0
    %108 = vmatprep.subr.mxu0 0.0
    %109 = vmatpush2.msra.mxu0 0.0
    %110 = vmatprep.subr.mxu0 0.0
    %111 = vmatpush2.msra.mxu0 0.0
    %112 = vmatprep.subr.mxu0 0.0
    %113 = vmatpush2.msra.mxu0 0.0
    %114 = vmatprep.subr.mxu0 0.0
    %115 = vmatpush2.msra.mxu0 0.0
    %116 = vmatprep.subr.mxu0 0.0
    %117 = vmatpush2.msra.mxu0 0.0
    %118 = vmatprep.subr.mxu0 0.0
    %119 = vmatpush2.msra.mxu0 0.0
    %120 = vmatprep.subr.mxu0 0.0
    %121 = vmatpush2.msra.mxu0 0.0
    %122 = vmatprep.subr.mxu0 0.0
    %123 = vmatpush2.msra.mxu0 0.0
    %124 = vmatprep.subr.mxu0 0.0
    %125 = vmatpush2.msra.mxu0 0.0
    %126 = vmatprep.subr.mxu0 0.0
    %127 = vmatpush2.msra.mxu0 0.0
    %128 = vmatprep.mubr.f32.mxu0 0.0
    %129 = vmatmul.mubr.f32.gmra.mxu0 %v58
    %v130 = vpop.f32.mrf.mxu0
    %v131 = vadd.f32 %v54, %v130
    %v132 = vpop.f32.mrf.mxu0
    %133 = vdwg.mxu0
    %v134 = vmax.f32 %v131, 0.0
    %v135 = vld [vmem:[#allocation6] sm:$0x1]
    %v136 = vld [vmem:[#allocation2] sm:$0x1]
    %138 = vset.pattern.permute.xlu0 0
    %139 = vperm.xlu0 %138, %v136
    %v140 = vpop.permute.xlu0 %139
    %v142 = vlaneseq
    %v143 = vshrl.u32 %v142, 7
    %v144 = vsub.s32 0, %v143
    %v145 = vrot.slane %v140, %v144
    %vm146 = vcmask 48128
    %v148 = vsel %vm146, %v135, 0
    %vm150 = vcmask 1045504
    %v152 = vsel %vm150, %v134, 0
    %154 = vmatprep.subr.mxu0 0.0
    %155 = vmatpush1.msra.mxu0 0.0
    %156 = vmatprep.subr.mxu0 0.0
    %157 = vmatpush1.msra.mxu0 0.0
    %158 = vmatprep.subr.mxu0 0.0
    %159 = vmatpush1.msra.mxu0 0.0
    %160 = vmatprep.subr.mxu0 0.0
    %161 = vmatpush1.msra.mxu0 0.0
    %162 = vmatprep.subr.mxu0 0.0
    %163 = vmatpush1.msra.mxu0 0.0
    %164 = vmatprep.subr.mxu0 0.0
    %165 = vmatpush1.msra.mxu0 0.0
    %166 = vmatprep.subr.mxu0 0.0
    %167 = vmatpush1.msra.mxu0 0.0
    %168 = vmatprep.subr.mxu0 0.0
    %169 = vmatpush1.msra.mxu0 0.0
    %170 = vmatprep.subr.mxu0 0.0
    %171 = vmatpush1.msra.mxu0 0.0
    %172 = vmatprep.subr.mxu0 0.0
    %173 = vmatpush1.msra.mxu0 0.0
    %174 = vmatprep.subr.mxu0 0.0
    %175 = vmatpush1.msra.mxu0 0.0
    %176 = vmatprep.subr.mxu0 0.0
    %177 = vmatpush1.msra.mxu0 0.0
    %178 = vmatprep.subr.mxu0 0.0
    %179 = vmatpush1.msra.mxu0 0.0
    %180 = vmatprep.subr.mxu0 0.0
    %181 = vmatpush1.msra.mxu0 0.0
    %182 = vmatprep.subr.mxu0 0.0
    %183 = vmatpush1.msra.mxu0 0.0
    %184 = vmatprep.subr.mxu0 0.0
    %185 = vmatpush1.msra.mxu0 %v152
    %186 = vmatprep.subr.mxu0 0.0
    %187 = vmatpush2.msra.mxu0 0.0
    %188 = vmatprep.subr.mxu0 0.0
    %189 = vmatpush2.msra.mxu0 0.0
    %190 = vmatprep.subr.mxu0 0.0
    %191 = vmatpush2.msra.mxu0 0.0
    %192 = vmatprep.subr.mxu0 0.0
    %193 = vmatpush2.msra.mxu0 0.0
    %194 = vmatprep.subr.mxu0 0.0
    %195 = vmatpush2.msra.mxu0 0.0
    %196 = vmatprep.subr.mxu0 0.0
    %197 = vmatpush2.msra.mxu0 0.0
    %198 = vmatprep.subr.mxu0 0.0
    %199 = vmatpush2.msra.mxu0 0.0
    %200 = vmatprep.subr.mxu0 0.0
    %201 = vmatpush2.msra.mxu0 0.0
    %202 = vmatprep.subr.mxu0 0.0
    %203 = vmatpush2.msra.mxu0 0.0
    %204 = vmatprep.subr.mxu0 0.0
    %205 = vmatpush2.msra.mxu0 0.0
    %206 = vmatprep.subr.mxu0 0.0
    %207 = vmatpush2.msra.mxu0 0.0
    %208 = vmatprep.subr.mxu0 0.0
    %209 = vmatpush2.msra.mxu0 0.0
    %210 = vmatprep.subr.mxu0 0.0
    %211 = vmatpush2.msra.mxu0 0.0
    %212 = vmatprep.subr.mxu0 0.0
    %213 = vmatpush2.msra.mxu0 0.0
    %214 = vmatprep.subr.mxu0 0.0
    %215 = vmatpush2.msra.mxu0 0.0
    %216 = vmatprep.subr.mxu0 0.0
    %217 = vmatpush2.msra.mxu0 0.0
    %218 = vmatprep.mubr.f32.mxu0 0.0
    %219 = vmatmul.mubr.f32.gmra.mxu0 %v148
    %v220 = vpop.f32.mrf.mxu0
    %v221 = vadd.f32 %v145, %v220
    %v222 = vpop.f32.mrf.mxu0
    %223 = vdwg.mxu0
    %v224 = vmax.f32 %v221, 0.0
    %v225 = vxor.u32 %v224, 2147483648
    %v226 = vmul.f32 %v225, 1.442695
    %v227 = vpow.pop %v226
    %v228 = vadd.f32 %v227, 1.0
    %v229 = vrcp.pop %v228
    %v230 = vmul.f32 1.0, %v229
    %231 = vst [vmem:[#allocation8] sm:$0x1] %v230
    // Predicated region
    $region30: #{tpu_custom_call.1} parent=1 // pred_check
      _
    $region31: #{tpu_custom_call.1} parent=1 // pred_check_branch
      %233 = sbr.rel (0) target = $region33
    $region32: #{tpu_custom_call.1} parent=1 // pred_region
      %s235 = ssub.s32 16, 16
      %236 = vsyncadd [#allocation5], %s235
      %s238 = sshll.u32 [#allocation8], 4
      %s239 = int_to_ptr.vmem [resolvable:$true] %s238
      %241 = dma.vmem_to_hbm [thread:$0]  %s239, 16, %s5, [#allocation5]
    $region33: #{tpu_custom_call.1} parent=1 // pred_fallthru
      _
    // Predicated region
    $region34: #{tpu_custom_call.1} parent=1 // pred_check
      _
    $region35: #{tpu_custom_call.1} parent=1 // pred_check_branch
      %243 = sbr.rel (0) target = $region37
    $region36: #{tpu_custom_call.1} parent=1 // pred_region
      %244 = dma.done [#allocation5], 16
    $region37: #{tpu_custom_call.1} parent=1 // pred_fallthru
      _
    %245 = vsyncpa [#allocation4], 1
    %246 = vsyncpa [#allocation7], 1
    %247 = vsyncpa [#allocation5], 1

</llo_original>
